<compile_context>
chip_gen: v5e
topology: v5e:2x2
jax: 0.10.0
libtpu: 0.0.40
codegen_flags: <defaults>
</compile_context>

<pallas_src>
import jax
import jax.numpy as jnp
from jax.experimental import pallas as pl
from jax.experimental.pallas import tpu as pltpu

# Logical (PyTorch) sizes.
IN_FEATURES = 32     # "input_shape" argument of Net
H1 = 164
H2 = 64
OUT = 3

# Padded (lane-friendly) sizes used inside the kernel.
H1P = 256            # 164 -> 256 (multiple of 128)
H2P = 128            # 64  -> 128
OUTP = 128           # 3   -> 128 (lane-dense output store)

BATCH_TILE = 256     # rows of x per grid step (multiple of 256 for v6e/v7x MXU)


def mlp_kernel(x_ref, w1_ref, b1_ref, w2_ref, b2_ref, w3_ref, b3_ref, o_ref):
    """Fused 3-layer MLP for one batch tile. bf16 operands, f32 accumulation."""
    x = x_ref[...]                                                   # (T, 32) bf16
    h1 = jnp.dot(x, w1_ref[...], preferred_element_type=jnp.float32) + b1_ref[...]
    h1 = jnp.maximum(h1, 0.0).astype(jnp.bfloat16)                   # (T, 256)
    h2 = jnp.dot(h1, w2_ref[...], preferred_element_type=jnp.float32) + b2_ref[...]
    h2 = jnp.maximum(h2, 0.0).astype(jnp.bfloat16)                   # (T, 128)
    y = jnp.dot(h2, w3_ref[...], preferred_element_type=jnp.float32) + b3_ref[...]
    o_ref[...] = y.astype(o_ref.dtype)                               # (T, 128) f32, lane-dense


def net_forward(x, params):
    """x: (B, 32) f32/bf16.  params: padded bf16 weights + f32 biases.  Returns (B, 3) f32."""
    w1, b1, w2, b2, w3, b3 = params
    B, D = x.shape
    assert D == IN_FEATURES

    # Pad the batch up to a tile multiple (handles arbitrary / ragged B).
    n_tiles = pl.cdiv(B, BATCH_TILE)
    Bp = n_tiles * BATCH_TILE
    xb = x.astype(jnp.bfloat16)
    if Bp != B:
        xb = jnp.pad(xb, ((0, Bp - B), (0, 0)))

    flops = 2 * Bp * (D * H1P + H1P * H2P + H2P * OUTP)
    bytes_accessed = (
        Bp * D * 2                                        # x (bf16)
        + (D * H1P + H1P * H2P + H2P * OUTP) * 2          # weights (bf16)
        + (H1P + H2P + OUTP) * 4                          # biases (f32)
        + Bp * OUTP * 4                                   # padded output (f32)
    )

    out_padded = pl.pallas_call(
        mlp_kernel,
        out_shape=jax.ShapeDtypeStruct((Bp, OUTP), jnp.float32),
        grid_spec=pltpu.PrefetchScalarGridSpec(
            num_scalar_prefetch=0,
            grid=(n_tiles,),
            in_specs=[
                # x: tiled over batch
                pl.BlockSpec((BATCH_TILE, D), lambda i: (i, 0)),
                # weights / biases: full arrays, constant block index => stay resident
                pl.BlockSpec((D, H1P), lambda i: (0, 0)),
                pl.BlockSpec((1, H1P), lambda i: (0, 0)),
                pl.BlockSpec((H1P, H2P), lambda i: (0, 0)),
                pl.BlockSpec((1, H2P), lambda i: (0, 0)),
                pl.BlockSpec((H2P, OUTP), lambda i: (0, 0)),
                pl.BlockSpec((1, OUTP), lambda i: (0, 0)),
            ],
            out_specs=pl.BlockSpec((BATCH_TILE, OUTP), lambda i: (i, 0)),
        ),
        compiler_params=pltpu.CompilerParams(
            dimension_semantics=("parallel",)),
        cost_estimate=pl.CostEstimate(
            flops=flops, transcendentals=0, bytes_accessed=bytes_accessed),
    )(xb, w1, b1, w2, b2, w3, b3)

    # Strip batch padding and the lane padding of the output.
    return out_padded[:B, :OUT]


# ---------------------------------------------------------------------------
# Parameter construction / references
# ---------------------------------------------------------------------------

def init_logical_params(key):
    """f32 params with the logical nn.Linear shapes (stored as (in, out))."""
    ks = jax.random.split(key, 6)
    w1 = jax.random.normal(ks[0], (IN_FEATURES, H1), jnp.float32) * 0.1
    b1 = jax.random.normal(ks[1], (H1,), jnp.float32) * 0.1
    w2 = jax.random.normal(ks[2], (H1, H2), jnp.float32) * 0.1
    b2 = jax.random.normal(ks[3], (H2,), jnp.float32) * 0.1
    w3 = jax.random.normal(ks[4], (H2, OUT), jnp.float32) * 0.1
    b3 = jax.random.normal(ks[5], (OUT,), jnp.float32) * 0.1
    return w1, b1, w2, b2, w3, b3


def pack_params(logical):
    """Zero-pad to lane-friendly shapes; weights -> bf16, biases stay f32."""
    w1, b1, w2, b2, w3, b3 = logical
    w1p = jnp.zeros((IN_FEATURES, H1P), jnp.float32).at[:, :H1].set(w1).astype(jnp.bfloat16)
    b1p = jnp.zeros((1, H1P), jnp.float32).at[0, :H1].set(b1)
    w2p = jnp.zeros((H1P, H2P), jnp.float32).at[:H1, :H2].set(w2).astype(jnp.bfloat16)
    b2p = jnp.zeros((1, H2P), jnp.float32).at[0, :H2].set(b2)
    w3p = jnp.zeros((H2P, OUTP), jnp.float32).at[:H2, :OUT].set(w3).astype(jnp.bfloat16)
    b3p = jnp.zeros((1, OUTP), jnp.float32).at[0, :OUT].set(b3)
    return w1p, b1p, w2p, b2p, w3p, b3p


def net_forward_ref_bf16(x, packed):
    """Pure-JAX reference mirroring the kernel's bf16/f32 mixed precision."""
    w1, b1, w2, b2, w3, b3 = packed
    xb = x.astype(jnp.bfloat16)
    h1 = jnp.maximum(jnp.dot(xb, w1, preferred_element_type=jnp.float32) + b1, 0.0)
    h1 = h1.astype(jnp.bfloat16)
    h2 = jnp.maximum(jnp.dot(h1, w2, preferred_element_type=jnp.float32) + b2, 0.0)
    h2 = h2.astype(jnp.bfloat16)
    y = jnp.dot(h2, w3, preferred_element_type=jnp.float32) + b3
    return y[:, :OUT]


def net_forward_ref_f32(x, logical):
    """Full-f32 reference (exact PyTorch semantics) for a sanity bound."""
    w1, b1, w2, b2, w3, b3 = logical
    h1 = jnp.maximum(x @ w1 + b1, 0.0)
    h2 = jnp.maximum(h1 @ w2 + b2, 0.0)
    return h2 @ w3 + b3


if __name__ == "__main__":
    key = jax.random.PRNGKey(0)
    pkey, xkey = jax.random.split(key)
    logical = init_logical_params(pkey)
    packed = pack_params(logical)

    # Batch 512 -> two parallel grid steps of 256 rows (uses both v7x TCs).
    batch = 512
    x = jax.random.normal(xkey, (batch, IN_FEATURES), jnp.float32)

    out = net_forward(x, packed)
    jax.block_until_ready(out)
    assert out.shape == (batch, OUT)

    # Bit-level check against a reference with identical bf16/f32 precision.
    ref_bf16 = net_forward_ref_bf16(x, packed)
    assert jnp.allclose(out, ref_bf16, atol=1e-3, rtol=1e-3)

    # Looser sanity check against the exact f32 (PyTorch-semantics) forward.
    ref_f32 = net_forward_ref_f32(x, logical)
    assert jnp.allclose(out, ref_f32, atol=5e-2, rtol=5e-2)

    # Ragged small batch exercises the batch-padding path.
    x_small = jax.random.normal(xkey, (8, IN_FEATURES), jnp.float32)
    out_small = net_forward(x_small, packed)
    jax.block_until_ready(out_small)
    assert out_small.shape == (8, OUT)
    assert jnp.allclose(out_small, net_forward_ref_bf16(x_small, packed),
                        atol=1e-3, rtol=1e-3)

    print("KERNEL_OK")
</pallas_src>

<mosaic_0001>
module attributes {stable_mosaic.version = 11 : i64} {
  func.func @mlp_kernel(%arg0: i32, %arg1: memref<256x32xbf16, #tpu.memory_space<vmem>>, %arg2: memref<32x256xbf16, #tpu.memory_space<vmem>>, %arg3: memref<1x256xf32, #tpu.memory_space<vmem>>, %arg4: memref<256x128xbf16, #tpu.memory_space<vmem>>, %arg5: memref<1x128xf32, #tpu.memory_space<vmem>>, %arg6: memref<128x128xbf16, #tpu.memory_space<vmem>>, %arg7: memref<1x128xf32, #tpu.memory_space<vmem>>, %arg8: memref<256x128xf32, #tpu.memory_space<vmem>>) attributes {dimension_semantics = [#tpu.dimension_semantics<parallel>], iteration_bounds = array<i64: 2>, scalar_prefetch = 0 : i64, scratch_operands = 0 : i64, tpu.core_type = #tpu.core_type<tc>, window_params = [{transform_indices = @transform_0, window_bounds = array<i64: 256, 32>}, {pipeline_mode = #tpu.pipeline_mode<synchronous>, transform_indices = @transform_1, window_bounds = array<i64: 32, 256>}, {pipeline_mode = #tpu.pipeline_mode<synchronous>, transform_indices = @transform_2, window_bounds = array<i64: 1, 256>}, {pipeline_mode = #tpu.pipeline_mode<synchronous>, transform_indices = @transform_3, window_bounds = array<i64: 256, 128>}, {pipeline_mode = #tpu.pipeline_mode<synchronous>, transform_indices = @transform_4, window_bounds = array<i64: 1, 128>}, {pipeline_mode = #tpu.pipeline_mode<synchronous>, transform_indices = @transform_5, window_bounds = array<i64: 128, 128>}, {pipeline_mode = #tpu.pipeline_mode<synchronous>, transform_indices = @transform_6, window_bounds = array<i64: 1, 128>}, {transform_indices = @transform_7, window_bounds = array<i64: 256, 128>}]} {
    %c0 = arith.constant 0 : index
    %c0_0 = arith.constant 0 : index
    %0 = vector.load %arg1[%c0, %c0_0] : memref<256x32xbf16, #tpu.memory_space<vmem>>, vector<256x32xbf16>
    %c0_1 = arith.constant 0 : index
    %c0_2 = arith.constant 0 : index
    %1 = vector.load %arg2[%c0_1, %c0_2] : memref<32x256xbf16, #tpu.memory_space<vmem>>, vector<32x256xbf16>
    %cst = arith.constant dense<0.000000e+00> : vector<256x256xf32>
    %2 = tpu.matmul %0, %1, %cst {dimension_numbers = #tpu.dot_dimension_numbers<[1], [0], [0], [1], [0, 0, 1, 1], [], []>} : vector<256x32xbf16>, vector<32x256xbf16>, vector<256x256xf32> -> vector<256x256xf32>
    %c0_3 = arith.constant 0 : index
    %c0_4 = arith.constant 0 : index
    %3 = vector.load %arg3[%c0_3, %c0_4] : memref<1x256xf32, #tpu.memory_space<vmem>>, vector<1x256xf32>
    %4 = vector.broadcast %3 : vector<1x256xf32> to vector<256x256xf32>
    %5 = arith.addf %2, %4 : vector<256x256xf32>
    %cst_5 = arith.constant 0.000000e+00 : f32
    %6 = vector.broadcast %cst_5 : f32 to vector<256x256xf32>
    %7 = arith.maximumf %5, %6 : vector<256x256xf32>
    %8 = arith.truncf %7 : vector<256x256xf32> to vector<256x256xbf16>
    %c0_6 = arith.constant 0 : index
    %c0_7 = arith.constant 0 : index
    %9 = vector.load %arg4[%c0_6, %c0_7] : memref<256x128xbf16, #tpu.memory_space<vmem>>, vector<256x128xbf16>
    %cst_8 = arith.constant dense<0.000000e+00> : vector<256x128xf32>
    %10 = tpu.matmul %8, %9, %cst_8 {dimension_numbers = #tpu.dot_dimension_numbers<[1], [0], [0], [1], [0, 0, 1, 1], [], []>} : vector<256x256xbf16>, vector<256x128xbf16>, vector<256x128xf32> -> vector<256x128xf32>
    %c0_9 = arith.constant 0 : index
    %c0_10 = arith.constant 0 : index
    %11 = vector.load %arg5[%c0_9, %c0_10] : memref<1x128xf32, #tpu.memory_space<vmem>>, vector<1x128xf32>
    %12 = vector.broadcast %11 : vector<1x128xf32> to vector<256x128xf32>
    %13 = arith.addf %10, %12 : vector<256x128xf32>
    %cst_11 = arith.constant 0.000000e+00 : f32
    %14 = vector.broadcast %cst_11 : f32 to vector<256x128xf32>
    %15 = arith.maximumf %13, %14 : vector<256x128xf32>
    %16 = arith.truncf %15 : vector<256x128xf32> to vector<256x128xbf16>
    %c0_12 = arith.constant 0 : index
    %c0_13 = arith.constant 0 : index
    %17 = vector.load %arg6[%c0_12, %c0_13] : memref<128x128xbf16, #tpu.memory_space<vmem>>, vector<128x128xbf16>
    %cst_14 = arith.constant dense<0.000000e+00> : vector<256x128xf32>
    %18 = tpu.matmul %16, %17, %cst_14 {dimension_numbers = #tpu.dot_dimension_numbers<[1], [0], [0], [1], [0, 0, 1, 1], [], []>} : vector<256x128xbf16>, vector<128x128xbf16>, vector<256x128xf32> -> vector<256x128xf32>
    %c0_15 = arith.constant 0 : index
    %c0_16 = arith.constant 0 : index
    %19 = vector.load %arg7[%c0_15, %c0_16] : memref<1x128xf32, #tpu.memory_space<vmem>>, vector<1x128xf32>
    %20 = vector.broadcast %19 : vector<1x128xf32> to vector<256x128xf32>
    %21 = arith.addf %18, %20 : vector<256x128xf32>
    %c0_17 = arith.constant 0 : index
    %c0_18 = arith.constant 0 : index
    %22 = vector.load %arg8[%c0_17, %c0_18] : memref<256x128xf32, #tpu.memory_space<vmem>>, vector<256x128xf32>
    tpu.vector_store %arg8[%c0_17, %c0_18], %21 {strides = array<i32>} : memref<256x128xf32, #tpu.memory_space<vmem>>, vector<256x128xf32>,
    return
  }
  func.func @transform_0(%arg0: i32) -> (i32, i32) {
    %c0_i32 = arith.constant 0 : i32
    %c0_i32_0 = arith.constant 0 : i32
    return %arg0, %c0_i32 : i32, i32
  }
  func.func @transform_1(%arg0: i32) -> (i32, i32) {
    %c0_i32 = arith.constant 0 : i32
    %c0_i32_0 = arith.constant 0 : i32
    %c0_i32_1 = arith.constant 0 : i32
    return %c0_i32, %c0_i32_0 : i32, i32
  }
  func.func @transform_2(%arg0: i32) -> (i32, i32) {
    %c0_i32 = arith.constant 0 : i32
    %c0_i32_0 = arith.constant 0 : i32
    %c0_i32_1 = arith.constant 0 : i32
    return %c0_i32, %c0_i32_0 : i32, i32
  }
  func.func @transform_3(%arg0: i32) -> (i32, i32) {
    %c0_i32 = arith.constant 0 : i32
    %c0_i32_0 = arith.constant 0 : i32
    %c0_i32_1 = arith.constant 0 : i32
    return %c0_i32, %c0_i32_0 : i32, i32
  }
  func.func @transform_4(%arg0: i32) -> (i32, i32) {
    %c0_i32 = arith.constant 0 : i32
    %c0_i32_0 = arith.constant 0 : i32
    %c0_i32_1 = arith.constant 0 : i32
    return %c0_i32, %c0_i32_0 : i32, i32
  }
  func.func @transform_5(%arg0: i32) -> (i32, i32) {
    %c0_i32 = arith.constant 0 : i32
    %c0_i32_0 = arith.constant 0 : i32
    %c0_i32_1 = arith.constant 0 : i32
    return %c0_i32, %c0_i32_0 : i32, i32
  }
  func.func @transform_6(%arg0: i32) -> (i32, i32) {
    %c0_i32 = arith.constant 0 : i32
    %c0_i32_0 = arith.constant 0 : i32
    %c0_i32_1 = arith.constant 0 : i32
    return %c0_i32, %c0_i32_0 : i32, i32
  }
  func.func @transform_7(%arg0: i32) -> (i32, i32) {
    %c0_i32 = arith.constant 0 : i32
    %c0_i32_0 = arith.constant 0 : i32
    return %arg0, %c0_i32 : i32, i32
  }
}

</mosaic_0001>

<llo_original>
// kernel: tpu_custom_call.1
$region0: #{tpu_custom_call.1}
  #allocation0 [shape = 'u32[]', space=smem, size = 0x4, offset = 0x4, fixed_abs, tag = 'smem constant byte address 0x4 - core index']
  #allocation1 [shape = 'u32[72,128]{1,0:T(1,128)}', space=vmem, size = 0x9000, scoped, tag = 'internal scratch']
  %s0 = inlined_call_operand.vmem [shape: bf16[512,32], index: 0, kind: input, shape index: {}]
  %s1 = inlined_call_operand.vmem [shape: bf16[32,256], index: 1, kind: input, shape index: {}]
  %s2 = inlined_call_operand.vmem [shape: f32[1,256], index: 2, kind: input, shape index: {}]
  %s3 = inlined_call_operand.vmem [shape: bf16[256,128], index: 3, kind: input, shape index: {}]
  %s4 = inlined_call_operand.vmem [shape: f32[1,128], index: 4, kind: input, shape index: {}]
  %s5 = inlined_call_operand.vmem [shape: bf16[128,128], index: 5, kind: input, shape index: {}]
  %s6 = inlined_call_operand.vmem [shape: f32[1,128], index: 6, kind: input, shape index: {}]
  %s7 = inlined_call_operand.hbm [shape: f32[512,128], index: 7, kind: output, shape index: {}]
  %s8 = sld [smem:[#allocation0]]
  $region61: #{tpu_custom_call.1} parent=0
    _
  %s10 = ssub.s32 1, %s8
  %s11 = scalar_select 0, %s10, %s8
  $region1: #{tpu_custom_call.1} parent=0
    #allocation2 [shape = 'u8[262144]{0}', space=vmem, size = 0x40000, scoped, tag = 'output window, operand 0']
    #allocation3 [shape = 's32[2]{0}', space=sflag, size = 0x8, scoped, tag = 'scoped memory for tpu_custom_call.1']
    %12 = vsyncpa [#allocation3], 0
    %s13 = scalar_lea.sflag [#allocation3], 1
    %14 = vsyncpa %s13, 0
    loop: start=0, step=1, limit=4
    $region2: #{tpu_custom_call.1} parent=1 // loop_pre_header
      _
    $region3: #{tpu_custom_call.1} parent=1 // loop_header
      %s16 = sphi 0, %s20
      %p17 = scmp.ge.s32.totalorder %s16, 4
      %s26 = sphi 0, %s28
      %s29 = sphi 0, %s26
      %s30 = sphi 0, %s29
      %s46 = sphi 0, %s30
      %s50 = sphi 0, %s50
      %s52 = sphi 0, %s50
      %s53 = sphi 0, %s52
      %s67 = sphi 0, %s53
      %s71 = sphi 0, %s71
      %s73 = sphi 0, %s71
      %s74 = sphi 0, %s73
      %s88 = sphi 0, %s74
      %s92 = sphi 0, %s92
      %s94 = sphi 0, %s92
      %s95 = sphi 0, %s94
      %s109 = sphi 0, %s95
      %s113 = sphi 0, %s113
      %s115 = sphi 0, %s113
      %s116 = sphi 0, %s115
      %s130 = sphi 0, %s116
      %s134 = sphi 0, %s134
      %s136 = sphi 0, %s134
      %s137 = sphi 0, %s136
      %s151 = sphi 0, %s137
      %s155 = sphi 0, %s155
      %s157 = sphi 0, %s155
      %s158 = sphi 0, %s157
      %s172 = sphi 0, %s158
      %s178 = sphi 0, %s180
      %s181 = sphi 0, %s178
      %s182 = sphi 0, %s181
      %s198 = sphi 0, %s182
    $region4: #{tpu_custom_call.1} parent=1 // loop_header_branch
      %19 = sbr.rel (%p17) target = $region8
    $region5: #{tpu_custom_call.1} parent=1 // loop_body
      %s21 = ssub.s32 %s16, 1
      %s22 = ssub.s32 %s16, 2
      %s23 = sadd.s32 %s16, 1
      %s24 = ssub.s32 %s16, %s23
      %p25 = scmp.eq.s32.totalorder %s24, 0
      %s27 = sadd.s32 %s26, 1
      %s28 = scalar_select %p25, %s26, %s27
      %p31 = pneg %p25
      %p32 = scmp.eq.s32.totalorder %s16, 1
      %p33 = por %p31, %p32
      %p34 = scmp.ne.s32.totalorder %s26, %s29
      %p35 = scmp.eq.s32.totalorder %s16, 0
      %p36 = por %p34, %p35
      %p37 = scmp.ne.s32.totalorder %s26, %s29
      %p38 = scmp.eq.s32.totalorder %s21, 1
      %p39 = por %p37, %p38
      %p40 = scmp.ne.s32.totalorder %s29, %s30
      %p41 = scmp.eq.s32.totalorder %s21, 0
      %p42 = por %p40, %p41
      %p43 = scmp.ne.s32.totalorder %s29, %s30
      %p44 = scmp.eq.s32.totalorder %s22, 1
      %p45 = por %p43, %p44
      %p47 = scmp.ne.s32.totalorder %s30, %s46
      %p48 = scmp.eq.s32.totalorder %s22, 0
      %p49 = por %p47, %p48
      %s51 = sadd.s32 %s50, 1
      %p54 = scmp.eq.s32.totalorder %s16, 1
      %p55 = scmp.ne.s32.totalorder %s50, %s52
      %p56 = scmp.eq.s32.totalorder %s16, 0
      %p57 = por %p55, %p56
      %p58 = scmp.ne.s32.totalorder %s50, %s52
      %p59 = scmp.eq.s32.totalorder %s21, 1
      %p60 = por %p58, %p59
      %p61 = scmp.ne.s32.totalorder %s52, %s53
      %p62 = scmp.eq.s32.totalorder %s21, 0
      %p63 = por %p61, %p62
      %p64 = scmp.ne.s32.totalorder %s52, %s53
      %p65 = scmp.eq.s32.totalorder %s22, 1
      %p66 = por %p64, %p65
      %p68 = scmp.ne.s32.totalorder %s53, %s67
      %p69 = scmp.eq.s32.totalorder %s22, 0
      %p70 = por %p68, %p69
      %s72 = sadd.s32 %s71, 1
      %p75 = scmp.eq.s32.totalorder %s16, 1
      %p76 = scmp.ne.s32.totalorder %s71, %s73
      %p77 = scmp.eq.s32.totalorder %s16, 0
      %p78 = por %p76, %p77
      %p79 = scmp.ne.s32.totalorder %s71, %s73
      %p80 = scmp.eq.s32.totalorder %s21, 1
      %p81 = por %p79, %p80
      %p82 = scmp.ne.s32.totalorder %s73, %s74
      %p83 = scmp.eq.s32.totalorder %s21, 0
      %p84 = por %p82, %p83
      %p85 = scmp.ne.s32.totalorder %s73, %s74
      %p86 = scmp.eq.s32.totalorder %s22, 1
      %p87 = por %p85, %p86
      %p89 = scmp.ne.s32.totalorder %s74, %s88
      %p90 = scmp.eq.s32.totalorder %s22, 0
      %p91 = por %p89, %p90
      %s93 = sadd.s32 %s92, 1
      %p96 = scmp.eq.s32.totalorder %s16, 1
      %p97 = scmp.ne.s32.totalorder %s92, %s94
      %p98 = scmp.eq.s32.totalorder %s16, 0
      %p99 = por %p97, %p98
      %p100 = scmp.ne.s32.totalorder %s92, %s94
      %p101 = scmp.eq.s32.totalorder %s21, 1
      %p102 = por %p100, %p101
      %p103 = scmp.ne.s32.totalorder %s94, %s95
      %p104 = scmp.eq.s32.totalorder %s21, 0
      %p105 = por %p103, %p104
      %p106 = scmp.ne.s32.totalorder %s94, %s95
      %p107 = scmp.eq.s32.totalorder %s22, 1
      %p108 = por %p106, %p107
      %p110 = scmp.ne.s32.totalorder %s95, %s109
      %p111 = scmp.eq.s32.totalorder %s22, 0
      %p112 = por %p110, %p111
      %s114 = sadd.s32 %s113, 1
      %p117 = scmp.eq.s32.totalorder %s16, 1
      %p118 = scmp.ne.s32.totalorder %s113, %s115
      %p119 = scmp.eq.s32.totalorder %s16, 0
      %p120 = por %p118, %p119
      %p121 = scmp.ne.s32.totalorder %s113, %s115
      %p122 = scmp.eq.s32.totalorder %s21, 1
      %p123 = por %p121, %p122
      %p124 = scmp.ne.s32.totalorder %s115, %s116
      %p125 = scmp.eq.s32.totalorder %s21, 0
      %p126 = por %p124, %p125
      %p127 = scmp.ne.s32.totalorder %s115, %s116
      %p128 = scmp.eq.s32.totalorder %s22, 1
      %p129 = por %p127, %p128
      %p131 = scmp.ne.s32.totalorder %s116, %s130
      %p132 = scmp.eq.s32.totalorder %s22, 0
      %p133 = por %p131, %p132
      %s135 = sadd.s32 %s134, 1
      %p138 = scmp.eq.s32.totalorder %s16, 1
      %p139 = scmp.ne.s32.totalorder %s134, %s136
      %p140 = scmp.eq.s32.totalorder %s16, 0
      %p141 = por %p139, %p140
      %p142 = scmp.ne.s32.totalorder %s134, %s136
      %p143 = scmp.eq.s32.totalorder %s21, 1
      %p144 = por %p142, %p143
      %p145 = scmp.ne.s32.totalorder %s136, %s137
      %p146 = scmp.eq.s32.totalorder %s21, 0
      %p147 = por %p145, %p146
      %p148 = scmp.ne.s32.totalorder %s136, %s137
      %p149 = scmp.eq.s32.totalorder %s22, 1
      %p150 = por %p148, %p149
      %p152 = scmp.ne.s32.totalorder %s137, %s151
      %p153 = scmp.eq.s32.totalorder %s22, 0
      %p154 = por %p152, %p153
      %s156 = sadd.s32 %s155, 1
      %p159 = scmp.eq.s32.totalorder %s16, 1
      %p160 = scmp.ne.s32.totalorder %s155, %s157
      %p161 = scmp.eq.s32.totalorder %s16, 0
      %p162 = por %p160, %p161
      %p163 = scmp.ne.s32.totalorder %s155, %s157
      %p164 = scmp.eq.s32.totalorder %s21, 1
      %p165 = por %p163, %p164
      %p166 = scmp.ne.s32.totalorder %s157, %s158
      %p167 = scmp.eq.s32.totalorder %s21, 0
      %p168 = por %p166, %p167
      %p169 = scmp.ne.s32.totalorder %s157, %s158
      %p170 = scmp.eq.s32.totalorder %s22, 1
      %p171 = por %p169, %p170
      %p173 = scmp.ne.s32.totalorder %s158, %s172
      %p174 = scmp.eq.s32.totalorder %s22, 0
      %p175 = por %p173, %p174
      %s176 = ssub.s32 %s16, %s23
      %p177 = scmp.eq.s32.totalorder %s176, 0
      %s179 = sadd.s32 %s178, 1
      %s180 = scalar_select %p177, %s178, %s179
      %p183 = pneg %p177
      %p184 = scmp.eq.s32.totalorder %s16, 1
      %p185 = por %p183, %p184
      %p186 = scmp.ne.s32.totalorder %s178, %s181
      %p187 = scmp.eq.s32.totalorder %s16, 0
      %p188 = por %p186, %p187
      %p189 = scmp.ne.s32.totalorder %s178, %s181
      %p190 = scmp.eq.s32.totalorder %s21, 1
      %p191 = por %p189, %p190
      %p192 = scmp.ne.s32.totalorder %s181, %s182
      %p193 = scmp.eq.s32.totalorder %s21, 0
      %p194 = por %p192, %p193
      %p195 = scmp.ne.s32.totalorder %s181, %s182
      %p196 = scmp.eq.s32.totalorder %s22, 1
      %p197 = por %p195, %p196
      %p199 = scmp.ne.s32.totalorder %s182, %s198
      %p200 = scmp.eq.s32.totalorder %s22, 0
      %p201 = por %p199, %p200
      %p202 = scmp.le.s32.totalorder 1, %s16
      %p203 = scmp.lt.s32.totalorder %s16, 3
      %p204 = pnand %p202, %p203
      %p205 = pneg %p204
      // Predicated region
      $region9: #{tpu_custom_call.1} parent=5 // pred_check
        _
      $region10: #{tpu_custom_call.1} parent=5 // pred_check_branch
        %207 = sbr.rel (%p204) target = $region12
      $region11: #{tpu_custom_call.1} parent=5 // pred_region
        %s208 = ssub.s32 %s16, 1
        // Predicated region
        $region13: #{tpu_custom_call.1} parent=11 // pred_check
          %p209 = pneg %p63
        $region14: #{tpu_custom_call.1} parent=11 // pred_check_branch
          %211 = sbr.rel (%p209) target = $region16
        $region15: #{tpu_custom_call.1} parent=11 // pred_region
          _
        $region16: #{tpu_custom_call.1} parent=11 // pred_fallthru
          _
        // Predicated region
        $region17: #{tpu_custom_call.1} parent=11 // pred_check
          %p212 = pneg %p84
        $region18: #{tpu_custom_call.1} parent=11 // pred_check_branch
          %214 = sbr.rel (%p212) target = $region20
        $region19: #{tpu_custom_call.1} parent=11 // pred_region
          _
        $region20: #{tpu_custom_call.1} parent=11 // pred_fallthru
          _
        // Predicated region
        $region21: #{tpu_custom_call.1} parent=11 // pred_check
          %p215 = pneg %p105
        $region22: #{tpu_custom_call.1} parent=11 // pred_check_branch
          %217 = sbr.rel (%p215) target = $region24
        $region23: #{tpu_custom_call.1} parent=11 // pred_region
          _
        $region24: #{tpu_custom_call.1} parent=11 // pred_fallthru
          _
        // Predicated region
        $region25: #{tpu_custom_call.1} parent=11 // pred_check
          %p218 = pneg %p126
        $region26: #{tpu_custom_call.1} parent=11 // pred_check_branch
          %220 = sbr.rel (%p218) target = $region28
        $region27: #{tpu_custom_call.1} parent=11 // pred_region
          _
        $region28: #{tpu_custom_call.1} parent=11 // pred_fallthru
          _
        // Predicated region
        $region29: #{tpu_custom_call.1} parent=11 // pred_check
          %p221 = pneg %p147
        $region30: #{tpu_custom_call.1} parent=11 // pred_check_branch
          %223 = sbr.rel (%p221) target = $region32
        $region31: #{tpu_custom_call.1} parent=11 // pred_region
          _
        $region32: #{tpu_custom_call.1} parent=11 // pred_fallthru
          _
        // Predicated region
        $region33: #{tpu_custom_call.1} parent=11 // pred_check
          %p224 = pneg %p168
        $region34: #{tpu_custom_call.1} parent=11 // pred_check_branch
          %226 = sbr.rel (%p224) target = $region36
        $region35: #{tpu_custom_call.1} parent=11 // pred_region
          _
        $region36: #{tpu_custom_call.1} parent=11 // pred_fallthru
          _
      $region12: #{tpu_custom_call.1} parent=5 // pred_fallthru
        _
      %p227 = scmp.lt.s32.totalorder %s16, 2
      // Predicated region
      $region37: #{tpu_custom_call.1} parent=5 // pred_check
        %p228 = pneg %p227
      $region38: #{tpu_custom_call.1} parent=5 // pred_check_branch
        %230 = sbr.rel (%p228) target = $region40
      $region39: #{tpu_custom_call.1} parent=5 // pred_region
        // Predicated region
        $region41: #{tpu_custom_call.1} parent=39 // pred_check
          %p231 = pneg %p36
        $region42: #{tpu_custom_call.1} parent=39 // pred_check_branch
          %233 = sbr.rel (%p231) target = $region44
        $region43: #{tpu_custom_call.1} parent=39 // pred_region
          %s234 = smul.u32 32, %s16
          %p235 = scmp.lt.s32.totalorder %s234, 63
          %s236 = scalar_select %p235, %s234, 63
          %s237 = smul.addr %s236, 4
          %s238 = scalar_lea.vmem %s0, %s237
          %s239 = smul.u32 32, %s16
        $region44: #{tpu_custom_call.1} parent=39 // pred_fallthru
          _
      $region40: #{tpu_custom_call.1} parent=5 // pred_fallthru
        _
      %p240 = scmp.le.s32.totalorder 1, %s16
      %p241 = scmp.lt.s32.totalorder %s16, 3
      %p242 = pnand %p240, %p241
      %p243 = pneg %p242
      // Predicated region
      $region45: #{tpu_custom_call.1} parent=5 // pred_check
        _
      $region46: #{tpu_custom_call.1} parent=5 // pred_check_branch
        %245 = sbr.rel (%p242) target = $region48
      $region47: #{tpu_custom_call.1} parent=5 // pred_region
        %s246 = ssub.s32 %s16, 1
        %s247 = smul.u32 32, %s21
        %p248 = scmp.lt.s32.totalorder %s247, 63
        %s249 = scalar_select %p248, %s247, 63
        %s250 = smul.addr %s249, 4
        %s251 = scalar_lea.vmem %s0, %s250
        %p252 = pneg %p42
        %p253 = pneg %p39
        %p254 = pneg %p63
        %p255 = pneg %p60
        %p256 = pneg %p84
        %p257 = pneg %p81
        %p258 = pneg %p105
        %p259 = pneg %p102
        %p260 = pneg %p126
        %p261 = pneg %p123
        %p262 = pneg %p147
        %p263 = pneg %p144
        %p264 = pneg %p168
        %p265 = pneg %p165
        %p266 = pneg %p194
        %p267 = pneg %p191
        %s268 = sand.u32 %s181, 1
        %s269 = scalar_lea.sflag [#allocation3], %s268
        %s270 = sand.u32 %s181, 1
        %s271 = smul.addr %s270, 256
        %s272 = scalar_lea.vmem [#allocation2], %s271
        %s273 = smul.u32 32, %s21
        %p274 = scmp.lt.s32.totalorder %s273, 63
        %s275 = scalar_select %p274, %s273, 63
        %s276 = smul.addr %s275, 4
        %s277 = scalar_lea.vmem %s0, %s276
        %s278 = smul.u32 32, %s21
        %s279 = smul.u32 32, %s21
        %v281 = vld [vmem:[%s277] sm:$0xf]
        %v282 = vld [vmem:[%s277 + $0x4] sm:$0xf]
        %v283 = vld [vmem:[%s277 + $0x8] sm:$0xf]
        %v284 = vld [vmem:[%s277 + $0xc] sm:$0xf]
        %v285 = vld [vmem:[%s277 + $0x10] sm:$0xf]
        %v286 = vld [vmem:[%s277 + $0x14] sm:$0xf]
        %v287 = vld [vmem:[%s277 + $0x18] sm:$0xf]
        %v288 = vld [vmem:[%s277 + $0x1c] sm:$0xf]
        %v289 = vld [vmem:[%s277 + $0x20] sm:$0xf]
        %v290 = vld [vmem:[%s277 + $0x24] sm:$0xf]
        %v291 = vld [vmem:[%s277 + $0x28] sm:$0xf]
        %v292 = vld [vmem:[%s277 + $0x2c] sm:$0xf]
        %v293 = vld [vmem:[%s277 + $0x30] sm:$0xf]
        %v294 = vld [vmem:[%s277 + $0x34] sm:$0xf]
        %v295 = vld [vmem:[%s277 + $0x38] sm:$0xf]
        %v296 = vld [vmem:[%s277 + $0x3c] sm:$0xf]
        %v297 = vld [vmem:[%s277 + $0x40] sm:$0xf]
        %v298 = vld [vmem:[%s277 + $0x44] sm:$0xf]
        %v299 = vld [vmem:[%s277 + $0x48] sm:$0xf]
        %v300 = vld [vmem:[%s277 + $0x4c] sm:$0xf]
        %v301 = vld [vmem:[%s277 + $0x50] sm:$0xf]
        %v302 = vld [vmem:[%s277 + $0x54] sm:$0xf]
        %v303 = vld [vmem:[%s277 + $0x58] sm:$0xf]
        %v304 = vld [vmem:[%s277 + $0x5c] sm:$0xf]
        %v305 = vld [vmem:[%s277 + $0x60] sm:$0xf]
        %v306 = vld [vmem:[%s277 + $0x64] sm:$0xf]
        %v307 = vld [vmem:[%s277 + $0x68] sm:$0xf]
        %v308 = vld [vmem:[%s277 + $0x6c] sm:$0xf]
        %v309 = vld [vmem:[%s277 + $0x70] sm:$0xf]
        %v310 = vld [vmem:[%s277 + $0x74] sm:$0xf]
        %v311 = vld [vmem:[%s277 + $0x78] sm:$0xf]
        %v312 = vld [vmem:[%s277 + $0x7c] sm:$0xf]
        %v313 = vld [vmem:[%s1] sm:$0xff]
        %v314 = vld [vmem:[%s1 + $0x8] sm:$0xff]
        %v315 = vld [vmem:[%s1 + $0x10] sm:$0xff]
        %v316 = vld [vmem:[%s1 + $0x18] sm:$0xff]
        %v317 = vld [vmem:[%s2] sm:$0x3]
        %v319 = vperm.slane %v317, 0
        %v320 = vperm.slane %v317, 1
        %v355 = vunpack.c.l.b16 %v281
        %v356 = vunpack.c.l.b16 %v282
        %v357 = vunpack.c.l.b16 %v283
        %v358 = vunpack.c.l.b16 %v284
        %v359 = vunpack.c.l.b16 %v285
        %v360 = vunpack.c.l.b16 %v286
        %v361 = vunpack.c.l.b16 %v287
        %v362 = vunpack.c.l.b16 %v288
        %v363 = vunpack.c.l.b16 %v289
        %v364 = vunpack.c.l.b16 %v290
        %v365 = vunpack.c.l.b16 %v291
        %v366 = vunpack.c.l.b16 %v292
        %v367 = vunpack.c.l.b16 %v293
        %v368 = vunpack.c.l.b16 %v294
        %v369 = vunpack.c.l.b16 %v295
        %v370 = vunpack.c.l.b16 %v296
        %v371 = vunpack.c.l.b16 %v297
        %v372 = vunpack.c.l.b16 %v298
        %v373 = vunpack.c.l.b16 %v299
        %v374 = vunpack.c.l.b16 %v300
        %v375 = vunpack.c.l.b16 %v301
        %v376 = vunpack.c.l.b16 %v302
        %v377 = vunpack.c.l.b16 %v303
        %v378 = vunpack.c.l.b16 %v304
        %v379 = vunpack.c.l.b16 %v305
        %v380 = vunpack.c.l.b16 %v306
        %v381 = vunpack.c.l.b16 %v307
        %v382 = vunpack.c.l.b16 %v308
        %v383 = vunpack.c.l.b16 %v309
        %v384 = vunpack.c.l.b16 %v310
        %v385 = vunpack.c.l.b16 %v311
        %v386 = vunpack.c.l.b16 %v312
        %v387 = vpack.c.b16 %v356, %v355
        %v388 = vpack.c.b16 %v358, %v357
        %v389 = vpack.c.b16 %v360, %v359
        %v390 = vpack.c.b16 %v362, %v361
        %v391 = vpack.c.b16 %v364, %v363
        %v392 = vpack.c.b16 %v366, %v365
        %v393 = vpack.c.b16 %v368, %v367
        %v394 = vpack.c.b16 %v370, %v369
        %v395 = vpack.c.b16 %v372, %v371
        %v396 = vpack.c.b16 %v374, %v373
        %v397 = vpack.c.b16 %v376, %v375
        %v398 = vpack.c.b16 %v378, %v377
        %v399 = vpack.c.b16 %v380, %v379
        %v400 = vpack.c.b16 %v382, %v381
        %v401 = vpack.c.b16 %v384, %v383
        %v402 = vpack.c.b16 %v386, %v385
        %v407 = vunpack.c.l.b16 %v313
        %v408 = vunpack.c.h.b16 %v313
        %v409 = vunpack.c.l.b16 %v314
        %v410 = vunpack.c.h.b16 %v314
        %v411 = vunpack.c.l.b16 %v315
        %v412 = vunpack.c.h.b16 %v315
        %v413 = vunpack.c.l.b16 %v316
        %v414 = vunpack.c.h.b16 %v316
        %v415 = vpack.c.b16 %v409, %v407
        %v416 = vpack.c.b16 %v410, %v408
        %v417 = vpack.c.b16 %v413, %v411
        %v418 = vpack.c.b16 %v414, %v412
        %vm423 = vcmask 261120
        %v425 = vsel %vm423, %v387, 0
        %v428 = vsel %vm423, %v388, 0
        %v431 = vsel %vm423, %v389, 0
        %v434 = vsel %vm423, %v390, 0
        %v437 = vsel %vm423, %v391, 0
        %v440 = vsel %vm423, %v392, 0
        %v443 = vsel %vm423, %v393, 0
        %v446 = vsel %vm423, %v394, 0
        %v449 = vsel %vm423, %v395, 0
        %v452 = vsel %vm423, %v396, 0
        %v455 = vsel %vm423, %v397, 0
        %v458 = vsel %vm423, %v398, 0
        %v461 = vsel %vm423, %v399, 0
        %v464 = vsel %vm423, %v400, 0
        %v467 = vsel %vm423, %v401, 0
        %v470 = vsel %vm423, %v402, 0
        %472 = vmatpush.bf16.msra.mxu0 0
        %473 = vmatpush.bf16.msra.mxu0 0
        %474 = vmatpush.bf16.msra.mxu0 0
        %475 = vmatpush.bf16.msra.mxu0 0
        %476 = vmatpush.bf16.msra.mxu0 0
        %477 = vmatpush.bf16.msra.mxu0 0
        %478 = vmatpush.bf16.msra.mxu0 %v417
        %479 = vmatpush.bf16.msra.mxu0 %v415
        %480 = vmatmul.bf16.gmra.mxu0 %v425
        %v481 = vpop.f32.mrf.mxu0
        %v482 = vadd.f32 %v319, %v481
        %v483 = vpop.f32.mrf.mxu0
        %v484 = vadd.f32 %v319, %v483
        %485 = vmatmul.bf16.gmra.mxu0 %v428
        %v486 = vpop.f32.mrf.mxu0
        %v487 = vadd.f32 %v319, %v486
        %v488 = vpop.f32.mrf.mxu0
        %v489 = vadd.f32 %v319, %v488
        %490 = vmatmul.bf16.gmra.mxu0 %v431
        %v491 = vpop.f32.mrf.mxu0
        %v492 = vadd.f32 %v319, %v491
        %v493 = vpop.f32.mrf.mxu0
        %v494 = vadd.f32 %v319, %v493
        %495 = vmatmul.bf16.gmra.mxu0 %v434
        %v496 = vpop.f32.mrf.mxu0
        %v497 = vadd.f32 %v319, %v496
        %v498 = vpop.f32.mrf.mxu0
        %v499 = vadd.f32 %v319, %v498
        %500 = vmatmul.bf16.gmra.mxu0 %v437
        %v501 = vpop.f32.mrf.mxu0
        %v502 = vadd.f32 %v319, %v501
        %v503 = vpop.f32.mrf.mxu0
        %v504 = vadd.f32 %v319, %v503
        %505 = vmatmul.bf16.gmra.mxu0 %v440
        %v506 = vpop.f32.mrf.mxu0
        %v507 = vadd.f32 %v319, %v506
        %v508 = vpop.f32.mrf.mxu0
        %v509 = vadd.f32 %v319, %v508
        %510 = vmatmul.bf16.gmra.mxu0 %v443
        %v511 = vpop.f32.mrf.mxu0
        %v512 = vadd.f32 %v319, %v511
        %v513 = vpop.f32.mrf.mxu0
        %v514 = vadd.f32 %v319, %v513
        %515 = vmatmul.bf16.gmra.mxu0 %v446
        %v516 = vpop.f32.mrf.mxu0
        %v517 = vadd.f32 %v319, %v516
        %v518 = vpop.f32.mrf.mxu0
        %v519 = vadd.f32 %v319, %v518
        %520 = vmatmul.bf16.gmra.mxu0 %v449
        %v521 = vpop.f32.mrf.mxu0
        %v522 = vadd.f32 %v319, %v521
        %v523 = vpop.f32.mrf.mxu0
        %v524 = vadd.f32 %v319, %v523
        %525 = vmatmul.bf16.gmra.mxu0 %v452
        %v526 = vpop.f32.mrf.mxu0
        %v527 = vadd.f32 %v319, %v526
        %v528 = vpop.f32.mrf.mxu0
        %v529 = vadd.f32 %v319, %v528
        %530 = vmatmul.bf16.gmra.mxu0 %v455
        %v531 = vpop.f32.mrf.mxu0
        %v532 = vadd.f32 %v319, %v531
        %v533 = vpop.f32.mrf.mxu0
        %v534 = vadd.f32 %v319, %v533
        %535 = vmatmul.bf16.gmra.mxu0 %v458
        %v536 = vpop.f32.mrf.mxu0
        %v537 = vadd.f32 %v319, %v536
        %v538 = vpop.f32.mrf.mxu0
        %v539 = vadd.f32 %v319, %v538
        %540 = vmatmul.bf16.gmra.mxu0 %v461
        %v541 = vpop.f32.mrf.mxu0
        %v542 = vadd.f32 %v319, %v541
        %v543 = vpop.f32.mrf.mxu0
        %v544 = vadd.f32 %v319, %v543
        %545 = vmatmul.bf16.gmra.mxu0 %v464
        %v546 = vpop.f32.mrf.mxu0
        %v547 = vadd.f32 %v319, %v546
        %v548 = vpop.f32.mrf.mxu0
        %v549 = vadd.f32 %v319, %v548
        %550 = vmatmul.bf16.gmra.mxu0 %v467
        %v551 = vpop.f32.mrf.mxu0
        %v552 = vadd.f32 %v319, %v551
        %v553 = vpop.f32.mrf.mxu0
        %v554 = vadd.f32 %v319, %v553
        %555 = vmatmul.bf16.gmra.mxu0 %v470
        %v556 = vpop.f32.mrf.mxu0
        %v557 = vadd.f32 %v319, %v556
        %v558 = vpop.f32.mrf.mxu0
        %v559 = vadd.f32 %v319, %v558
        %560 = vdwg.mxu0
        %561 = vmatpush.bf16.msra.mxu0 0
        %562 = vmatpush.bf16.msra.mxu0 0
        %563 = vmatpush.bf16.msra.mxu0 0
        %564 = vmatpush.bf16.msra.mxu0 0
        %565 = vmatpush.bf16.msra.mxu0 0
        %566 = vmatpush.bf16.msra.mxu0 0
        %567 = vmatpush.bf16.msra.mxu0 %v418
        %568 = vmatpush.bf16.msra.mxu0 %v416
        %569 = vmatmul.bf16.gmra.mxu0 %v425
        %v570 = vpop.f32.mrf.mxu0
        %v571 = vadd.f32 %v320, %v570
        %v572 = vpop.f32.mrf.mxu0
        %v573 = vadd.f32 %v320, %v572
        %574 = vmatmul.bf16.gmra.mxu0 %v428
        %v575 = vpop.f32.mrf.mxu0
        %v576 = vadd.f32 %v320, %v575
        %v577 = vpop.f32.mrf.mxu0
        %v578 = vadd.f32 %v320, %v577
        %579 = vmatmul.bf16.gmra.mxu0 %v431
        %v580 = vpop.f32.mrf.mxu0
        %v581 = vadd.f32 %v320, %v580
        %v582 = vpop.f32.mrf.mxu0
        %v583 = vadd.f32 %v320, %v582
        %584 = vmatmul.bf16.gmra.mxu0 %v434
        %v585 = vpop.f32.mrf.mxu0
        %v586 = vadd.f32 %v320, %v585
        %v587 = vpop.f32.mrf.mxu0
        %v588 = vadd.f32 %v320, %v587
        %589 = vmatmul.bf16.gmra.mxu0 %v437
        %v590 = vpop.f32.mrf.mxu0
        %v591 = vadd.f32 %v320, %v590
        %v592 = vpop.f32.mrf.mxu0
        %v593 = vadd.f32 %v320, %v592
        %594 = vmatmul.bf16.gmra.mxu0 %v440
        %v595 = vpop.f32.mrf.mxu0
        %v596 = vadd.f32 %v320, %v595
        %v597 = vpop.f32.mrf.mxu0
        %v598 = vadd.f32 %v320, %v597
        %599 = vmatmul.bf16.gmra.mxu0 %v443
        %v600 = vpop.f32.mrf.mxu0
        %v601 = vadd.f32 %v320, %v600
        %v602 = vpop.f32.mrf.mxu0
        %v603 = vadd.f32 %v320, %v602
        %604 = vmatmul.bf16.gmra.mxu0 %v446
        %v605 = vpop.f32.mrf.mxu0
        %v606 = vadd.f32 %v320, %v605
        %v607 = vpop.f32.mrf.mxu0
        %v608 = vadd.f32 %v320, %v607
        %609 = vmatmul.bf16.gmra.mxu0 %v449
        %v610 = vpop.f32.mrf.mxu0
        %v611 = vadd.f32 %v320, %v610
        %v612 = vpop.f32.mrf.mxu0
        %v613 = vadd.f32 %v320, %v612
        %614 = vmatmul.bf16.gmra.mxu0 %v452
        %v615 = vpop.f32.mrf.mxu0
        %v616 = vadd.f32 %v320, %v615
        %v617 = vpop.f32.mrf.mxu0
        %v618 = vadd.f32 %v320, %v617
        %619 = vmatmul.bf16.gmra.mxu0 %v455
        %v620 = vpop.f32.mrf.mxu0
        %v621 = vadd.f32 %v320, %v620
        %v622 = vpop.f32.mrf.mxu0
        %v623 = vadd.f32 %v320, %v622
        %624 = vmatmul.bf16.gmra.mxu0 %v458
        %v625 = vpop.f32.mrf.mxu0
        %v626 = vadd.f32 %v320, %v625
        %v627 = vpop.f32.mrf.mxu0
        %v628 = vadd.f32 %v320, %v627
        %629 = vmatmul.bf16.gmra.mxu0 %v461
        %v630 = vpop.f32.mrf.mxu0
        %v631 = vadd.f32 %v320, %v630
        %v632 = vpop.f32.mrf.mxu0
        %v633 = vadd.f32 %v320, %v632
        %634 = vmatmul.bf16.gmra.mxu0 %v464
        %v635 = vpop.f32.mrf.mxu0
        %v636 = vadd.f32 %v320, %v635
        %v637 = vpop.f32.mrf.mxu0
        %v638 = vadd.f32 %v320, %v637
        %639 = vmatmul.bf16.gmra.mxu0 %v467
        %v640 = vpop.f32.mrf.mxu0
        %v641 = vadd.f32 %v320, %v640
        %v642 = vpop.f32.mrf.mxu0
        %v643 = vadd.f32 %v320, %v642
        %644 = vmatmul.bf16.gmra.mxu0 %v470
        %v645 = vpop.f32.mrf.mxu0
        %v646 = vadd.f32 %v320, %v645
        %v647 = vpop.f32.mrf.mxu0
        %v648 = vadd.f32 %v320, %v647
        %649 = vdwg.mxu0
        %v650 = vmax.f32 %v482, 0.0
        %v651 = vmax.f32 %v571, 0.0
        %v652 = vmax.f32 %v484, 0.0
        %v653 = vmax.f32 %v573, 0.0
        %v654 = vmax.f32 %v487, 0.0
        %v655 = vmax.f32 %v576, 0.0
        %v656 = vmax.f32 %v489, 0.0
        %v657 = vmax.f32 %v578, 0.0
        %v658 = vmax.f32 %v492, 0.0
        %v659 = vmax.f32 %v581, 0.0
        %v660 = vmax.f32 %v494, 0.0
        %v661 = vmax.f32 %v583, 0.0
        %v662 = vmax.f32 %v497, 0.0
        %v663 = vmax.f32 %v586, 0.0
        %v664 = vmax.f32 %v499, 0.0
        %v665 = vmax.f32 %v588, 0.0
        %v666 = vmax.f32 %v502, 0.0
        %v667 = vmax.f32 %v591, 0.0
        %v668 = vmax.f32 %v504, 0.0
        %v669 = vmax.f32 %v593, 0.0
        %v670 = vmax.f32 %v507, 0.0
        %v671 = vmax.f32 %v596, 0.0
        %v672 = vmax.f32 %v509, 0.0
        %v673 = vmax.f32 %v598, 0.0
        %v674 = vmax.f32 %v512, 0.0
        %v675 = vmax.f32 %v601, 0.0
        %v676 = vmax.f32 %v514, 0.0
        %v677 = vmax.f32 %v603, 0.0
        %v678 = vmax.f32 %v517, 0.0
        %v679 = vmax.f32 %v606, 0.0
        %v680 = vmax.f32 %v519, 0.0
        %v681 = vmax.f32 %v608, 0.0
        %v682 = vmax.f32 %v522, 0.0
        %v683 = vmax.f32 %v611, 0.0
        %v684 = vmax.f32 %v524, 0.0
        %v685 = vmax.f32 %v613, 0.0
        %v686 = vmax.f32 %v527, 0.0
        %v687 = vmax.f32 %v616, 0.0
        %v688 = vmax.f32 %v529, 0.0
        %v689 = vmax.f32 %v618, 0.0
        %v690 = vmax.f32 %v532, 0.0
        %v691 = vmax.f32 %v621, 0.0
        %v692 = vmax.f32 %v534, 0.0
        %v693 = vmax.f32 %v623, 0.0
        %v694 = vmax.f32 %v537, 0.0
        %v695 = vmax.f32 %v626, 0.0
        %v696 = vmax.f32 %v539, 0.0
        %v697 = vmax.f32 %v628, 0.0
        %v698 = vmax.f32 %v542, 0.0
        %v699 = vmax.f32 %v631, 0.0
        %v700 = vmax.f32 %v544, 0.0
        %v701 = vmax.f32 %v633, 0.0
        %v702 = vmax.f32 %v547, 0.0
        %v703 = vmax.f32 %v636, 0.0
        %v704 = vmax.f32 %v549, 0.0
        %v705 = vmax.f32 %v638, 0.0
        %v706 = vmax.f32 %v552, 0.0
        %v707 = vmax.f32 %v641, 0.0
        %v708 = vmax.f32 %v554, 0.0
        %v709 = vmax.f32 %v643, 0.0
        %v710 = vmax.f32 %v557, 0.0
        %v711 = vmax.f32 %v646, 0.0
        %v712 = vmax.f32 %v559, 0.0
        %v713 = vmax.f32 %v648, 0.0
        %v714 = vpack.c.bf16 %v652, %v650
        %v715 = vpack.c.bf16 %v653, %v651
        %v716 = vpack.c.bf16 %v656, %v654
        %v717 = vpack.c.bf16 %v657, %v655
        %v718 = vpack.c.bf16 %v660, %v658
        %v719 = vpack.c.bf16 %v661, %v659
        %v720 = vpack.c.bf16 %v664, %v662
        %v721 = vpack.c.bf16 %v665, %v663
        %v722 = vpack.c.bf16 %v668, %v666
        %v723 = vpack.c.bf16 %v669, %v667
        %v724 = vpack.c.bf16 %v672, %v670
        %v725 = vpack.c.bf16 %v673, %v671
        %v726 = vpack.c.bf16 %v676, %v674
        %v727 = vpack.c.bf16 %v677, %v675
        %v728 = vpack.c.bf16 %v680, %v678
        %v729 = vpack.c.bf16 %v681, %v679
        %v730 = vpack.c.bf16 %v684, %v682
        %v731 = vpack.c.bf16 %v685, %v683
        %v732 = vpack.c.bf16 %v688, %v686
        %v733 = vpack.c.bf16 %v689, %v687
        %v734 = vpack.c.bf16 %v692, %v690
        %v735 = vpack.c.bf16 %v693, %v691
        %v736 = vpack.c.bf16 %v696, %v694
        %v737 = vpack.c.bf16 %v697, %v695
        %v738 = vpack.c.bf16 %v700, %v698
        %v739 = vpack.c.bf16 %v701, %v699
        %v740 = vpack.c.bf16 %v704, %v702
        %v741 = vpack.c.bf16 %v705, %v703
        %v742 = vpack.c.bf16 %v708, %v706
        %v743 = vpack.c.bf16 %v709, %v707
        %v744 = vpack.c.bf16 %v712, %v710
        %v745 = vpack.c.bf16 %v713, %v711
        %v746 = vld [vmem:[%s3] sm:$0xf]
        %v747 = vld [vmem:[%s3 + $0x4] sm:$0xf]
        %v748 = vld [vmem:[%s3 + $0x8] sm:$0xf]
        %v749 = vld [vmem:[%s3 + $0xc] sm:$0xf]
        %v750 = vld [vmem:[%s3 + $0x10] sm:$0xf]
        %v751 = vld [vmem:[%s3 + $0x14] sm:$0xf]
        %v752 = vld [vmem:[%s3 + $0x18] sm:$0xf]
        %v753 = vld [vmem:[%s3 + $0x1c] sm:$0xf]
        %v754 = vld [vmem:[%s3 + $0x20] sm:$0xf]
        %v755 = vld [vmem:[%s3 + $0x24] sm:$0xf]
        %v756 = vld [vmem:[%s3 + $0x28] sm:$0xf]
        %v757 = vld [vmem:[%s3 + $0x2c] sm:$0xf]
        %v758 = vld [vmem:[%s3 + $0x30] sm:$0xf]
        %v759 = vld [vmem:[%s3 + $0x34] sm:$0xf]
        %v760 = vld [vmem:[%s3 + $0x38] sm:$0xf]
        %v761 = vld [vmem:[%s3 + $0x3c] sm:$0xf]
        %v762 = vld [vmem:[%s3 + $0x40] sm:$0xf]
        %v763 = vld [vmem:[%s3 + $0x44] sm:$0xf]
        %v764 = vld [vmem:[%s3 + $0x48] sm:$0xf]
        %v765 = vld [vmem:[%s3 + $0x4c] sm:$0xf]
        %v766 = vld [vmem:[%s3 + $0x50] sm:$0xf]
        %v767 = vld [vmem:[%s3 + $0x54] sm:$0xf]
        %v768 = vld [vmem:[%s3 + $0x58] sm:$0xf]
        %v769 = vld [vmem:[%s3 + $0x5c] sm:$0xf]
        %v770 = vld [vmem:[%s3 + $0x60] sm:$0xf]
        %v771 = vld [vmem:[%s3 + $0x64] sm:$0xf]
        %v772 = vld [vmem:[%s3 + $0x68] sm:$0xf]
        %v773 = vld [vmem:[%s3 + $0x6c] sm:$0xf]
        %v774 = vld [vmem:[%s3 + $0x70] sm:$0xf]
        %v775 = vld [vmem:[%s3 + $0x74] sm:$0xf]
        %v776 = vld [vmem:[%s3 + $0x78] sm:$0xf]
        %v777 = vld [vmem:[%s3 + $0x7c] sm:$0xf]
        %v778 = vld [vmem:[%s4] sm:$0x1]
        %v780 = vperm.slane %v778, 0
        %v814 = vunpack.c.l.b16 %v746
        %v815 = vunpack.c.l.b16 %v747
        %v816 = vunpack.c.l.b16 %v748
        %v817 = vunpack.c.l.b16 %v749
        %v818 = vunpack.c.l.b16 %v750
        %v819 = vunpack.c.l.b16 %v751
        %v820 = vunpack.c.l.b16 %v752
        %v821 = vunpack.c.l.b16 %v753
        %v822 = vunpack.c.l.b16 %v754
        %v823 = vunpack.c.l.b16 %v755
        %v824 = vunpack.c.l.b16 %v756
        %v825 = vunpack.c.l.b16 %v757
        %v826 = vunpack.c.l.b16 %v758
        %v827 = vunpack.c.l.b16 %v759
        %v828 = vunpack.c.l.b16 %v760
        %v829 = vunpack.c.l.b16 %v761
        %v830 = vunpack.c.l.b16 %v762
        %v831 = vunpack.c.l.b16 %v763
        %v832 = vunpack.c.l.b16 %v764
        %v833 = vunpack.c.l.b16 %v765
        %v834 = vunpack.c.l.b16 %v766
        %v835 = vunpack.c.l.b16 %v767
        %v836 = vunpack.c.l.b16 %v768
        %v837 = vunpack.c.l.b16 %v769
        %v838 = vunpack.c.l.b16 %v770
        %v839 = vunpack.c.l.b16 %v771
        %v840 = vunpack.c.l.b16 %v772
        %v841 = vunpack.c.l.b16 %v773
        %v842 = vunpack.c.l.b16 %v774
        %v843 = vunpack.c.l.b16 %v775
        %v844 = vunpack.c.l.b16 %v776
        %v845 = vunpack.c.l.b16 %v777
        %v846 = vpack.c.b16 %v815, %v814
        %v847 = vpack.c.b16 %v817, %v816
        %v848 = vpack.c.b16 %v819, %v818
        %v849 = vpack.c.b16 %v821, %v820
        %v850 = vpack.c.b16 %v823, %v822
        %v851 = vpack.c.b16 %v825, %v824
        %v852 = vpack.c.b16 %v827, %v826
        %v853 = vpack.c.b16 %v829, %v828
        %v854 = vpack.c.b16 %v831, %v830
        %v855 = vpack.c.b16 %v833, %v832
        %v856 = vpack.c.b16 %v835, %v834
        %v857 = vpack.c.b16 %v837, %v836
        %v858 = vpack.c.b16 %v839, %v838
        %v859 = vpack.c.b16 %v841, %v840
        %v860 = vpack.c.b16 %v843, %v842
        %v861 = vpack.c.b16 %v845, %v844
        %878 = vmatpush.bf16.msra.mxu0 %v853
        %879 = vmatpush.bf16.msra.mxu0 %v852
        %880 = vmatpush.bf16.msra.mxu0 %v851
        %881 = vmatpush.bf16.msra.mxu0 %v850
        %882 = vmatpush.bf16.msra.mxu0 %v849
        %883 = vmatpush.bf16.msra.mxu0 %v848
        %884 = vmatpush.bf16.msra.mxu0 %v847
        %885 = vmatpush.bf16.msra.mxu0 %v846
        %886 = vmatmul.bf16.gmra.mxu0 %v714
        %v887 = vpop.f32.mrf.mxu0
        %v888 = vadd.f32 %v780, %v887
        %v889 = vpop.f32.mrf.mxu0
        %v890 = vadd.f32 %v780, %v889
        %891 = vmatmul.bf16.gmra.mxu0 %v716
        %v892 = vpop.f32.mrf.mxu0
        %v893 = vadd.f32 %v780, %v892
        %v894 = vpop.f32.mrf.mxu0
        %v895 = vadd.f32 %v780, %v894
        %896 = vmatmul.bf16.gmra.mxu0 %v718
        %v897 = vpop.f32.mrf.mxu0
        %v898 = vadd.f32 %v780, %v897
        %v899 = vpop.f32.mrf.mxu0
        %v900 = vadd.f32 %v780, %v899
        %901 = vmatmul.bf16.gmra.mxu0 %v720
        %v902 = vpop.f32.mrf.mxu0
        %v903 = vadd.f32 %v780, %v902
        %v904 = vpop.f32.mrf.mxu0
        %v905 = vadd.f32 %v780, %v904
        %906 = vmatmul.bf16.gmra.mxu0 %v722
        %v907 = vpop.f32.mrf.mxu0
        %v908 = vadd.f32 %v780, %v907
        %v909 = vpop.f32.mrf.mxu0
        %v910 = vadd.f32 %v780, %v909
        %911 = vmatmul.bf16.gmra.mxu0 %v724
        %v912 = vpop.f32.mrf.mxu0
        %v913 = vadd.f32 %v780, %v912
        %v914 = vpop.f32.mrf.mxu0
        %v915 = vadd.f32 %v780, %v914
        %916 = vmatmul.bf16.gmra.mxu0 %v726
        %v917 = vpop.f32.mrf.mxu0
        %v918 = vadd.f32 %v780, %v917
        %v919 = vpop.f32.mrf.mxu0
        %v920 = vadd.f32 %v780, %v919
        %921 = vmatmul.bf16.gmra.mxu0 %v728
        %v922 = vpop.f32.mrf.mxu0
        %v923 = vadd.f32 %v780, %v922
        %v924 = vpop.f32.mrf.mxu0
        %v925 = vadd.f32 %v780, %v924
        %926 = vmatmul.bf16.gmra.mxu0 %v730
        %v927 = vpop.f32.mrf.mxu0
        %v928 = vadd.f32 %v780, %v927
        %v929 = vpop.f32.mrf.mxu0
        %v930 = vadd.f32 %v780, %v929
        %931 = vmatmul.bf16.gmra.mxu0 %v732
        %v932 = vpop.f32.mrf.mxu0
        %v933 = vadd.f32 %v780, %v932
        %v934 = vpop.f32.mrf.mxu0
        %v935 = vadd.f32 %v780, %v934
        %936 = vmatmul.bf16.gmra.mxu0 %v734
        %v937 = vpop.f32.mrf.mxu0
        %v938 = vadd.f32 %v780, %v937
        %v939 = vpop.f32.mrf.mxu0
        %v940 = vadd.f32 %v780, %v939
        %941 = vmatmul.bf16.gmra.mxu0 %v736
        %v942 = vpop.f32.mrf.mxu0
        %v943 = vadd.f32 %v780, %v942
        %v944 = vpop.f32.mrf.mxu0
        %v945 = vadd.f32 %v780, %v944
        %946 = vmatmul.bf16.gmra.mxu0 %v738
        %v947 = vpop.f32.mrf.mxu0
        %v948 = vadd.f32 %v780, %v947
        %v949 = vpop.f32.mrf.mxu0
        %v950 = vadd.f32 %v780, %v949
        %951 = vmatmul.bf16.gmra.mxu0 %v740
        %v952 = vpop.f32.mrf.mxu0
        %v953 = vadd.f32 %v780, %v952
        %v954 = vpop.f32.mrf.mxu0
        %v955 = vadd.f32 %v780, %v954
        %956 = vmatmul.bf16.gmra.mxu0 %v742
        %v957 = vpop.f32.mrf.mxu0
        %v958 = vadd.f32 %v780, %v957
        %v959 = vpop.f32.mrf.mxu0
        %v960 = vadd.f32 %v780, %v959
        %961 = vmatmul.bf16.gmra.mxu0 %v744
        %v962 = vpop.f32.mrf.mxu0
        %v963 = vadd.f32 %v780, %v962
        %v964 = vpop.f32.mrf.mxu0
        %v965 = vadd.f32 %v780, %v964
        %966 = vdwg.mxu0
        %967 = vmatpush.bf16.msra.mxu0 %v861
        %968 = vmatpush.bf16.msra.mxu0 %v860
        %969 = vmatpush.bf16.msra.mxu0 %v859
        %970 = vmatpush.bf16.msra.mxu0 %v858
        %971 = vmatpush.bf16.msra.mxu0 %v857
        %972 = vmatpush.bf16.msra.mxu0 %v856
        %973 = vmatpush.bf16.msra.mxu0 %v855
        %974 = vmatpush.bf16.msra.mxu0 %v854
        %975 = vmatmul.bf16.gmra.mxu0 %v715
        %v976 = vpop.f32.mrf.mxu0
        %v977 = vadd.f32 %v888, %v976
        %v978 = vpop.f32.mrf.mxu0
        %v979 = vadd.f32 %v890, %v978
        %980 = vmatmul.bf16.gmra.mxu0 %v717
        %v981 = vpop.f32.mrf.mxu0
        %v982 = vadd.f32 %v893, %v981
        %v983 = vpop.f32.mrf.mxu0
        %v984 = vadd.f32 %v895, %v983
        %985 = vmatmul.bf16.gmra.mxu0 %v719
        %v986 = vpop.f32.mrf.mxu0
        %v987 = vadd.f32 %v898, %v986
        %v988 = vpop.f32.mrf.mxu0
        %v989 = vadd.f32 %v900, %v988
        %990 = vmatmul.bf16.gmra.mxu0 %v721
        %v991 = vpop.f32.mrf.mxu0
        %v992 = vadd.f32 %v903, %v991
        %v993 = vpop.f32.mrf.mxu0
        %v994 = vadd.f32 %v905, %v993
        %995 = vmatmul.bf16.gmra.mxu0 %v723
        %v996 = vpop.f32.mrf.mxu0
        %v997 = vadd.f32 %v908, %v996
        %v998 = vpop.f32.mrf.mxu0
        %v999 = vadd.f32 %v910, %v998
        %1000 = vmatmul.bf16.gmra.mxu0 %v725
        %v1001 = vpop.f32.mrf.mxu0
        %v1002 = vadd.f32 %v913, %v1001
        %v1003 = vpop.f32.mrf.mxu0
        %v1004 = vadd.f32 %v915, %v1003
        %1005 = vmatmul.bf16.gmra.mxu0 %v727
        %v1006 = vpop.f32.mrf.mxu0
        %v1007 = vadd.f32 %v918, %v1006
        %v1008 = vpop.f32.mrf.mxu0
        %v1009 = vadd.f32 %v920, %v1008
        %1010 = vmatmul.bf16.gmra.mxu0 %v729
        %v1011 = vpop.f32.mrf.mxu0
        %v1012 = vadd.f32 %v923, %v1011
        %v1013 = vpop.f32.mrf.mxu0
        %v1014 = vadd.f32 %v925, %v1013
        %1015 = vmatmul.bf16.gmra.mxu0 %v731
        %v1016 = vpop.f32.mrf.mxu0
        %v1017 = vadd.f32 %v928, %v1016
        %v1018 = vpop.f32.mrf.mxu0
        %v1019 = vadd.f32 %v930, %v1018
        %1020 = vmatmul.bf16.gmra.mxu0 %v733
        %v1021 = vpop.f32.mrf.mxu0
        %v1022 = vadd.f32 %v933, %v1021
        %v1023 = vpop.f32.mrf.mxu0
        %v1024 = vadd.f32 %v935, %v1023
        %1025 = vmatmul.bf16.gmra.mxu0 %v735
        %v1026 = vpop.f32.mrf.mxu0
        %v1027 = vadd.f32 %v938, %v1026
        %v1028 = vpop.f32.mrf.mxu0
        %v1029 = vadd.f32 %v940, %v1028
        %1030 = vmatmul.bf16.gmra.mxu0 %v737
        %v1031 = vpop.f32.mrf.mxu0
        %v1032 = vadd.f32 %v943, %v1031
        %v1033 = vpop.f32.mrf.mxu0
        %v1034 = vadd.f32 %v945, %v1033
        %1035 = vmatmul.bf16.gmra.mxu0 %v739
        %v1036 = vpop.f32.mrf.mxu0
        %v1037 = vadd.f32 %v948, %v1036
        %v1038 = vpop.f32.mrf.mxu0
        %v1039 = vadd.f32 %v950, %v1038
        %1040 = vmatmul.bf16.gmra.mxu0 %v741
        %v1041 = vpop.f32.mrf.mxu0
        %v1042 = vadd.f32 %v953, %v1041
        %v1043 = vpop.f32.mrf.mxu0
        %v1044 = vadd.f32 %v955, %v1043
        %1045 = vmatmul.bf16.gmra.mxu0 %v743
        %v1046 = vpop.f32.mrf.mxu0
        %v1047 = vadd.f32 %v958, %v1046
        %v1048 = vpop.f32.mrf.mxu0
        %v1049 = vadd.f32 %v960, %v1048
        %1050 = vmatmul.bf16.gmra.mxu0 %v745
        %v1051 = vpop.f32.mrf.mxu0
        %v1052 = vadd.f32 %v963, %v1051
        %v1053 = vpop.f32.mrf.mxu0
        %v1054 = vadd.f32 %v965, %v1053
        %1055 = vdwg.mxu0
        %v1056 = vmax.f32 %v977, 0.0
        %v1057 = vmax.f32 %v979, 0.0
        %v1058 = vmax.f32 %v982, 0.0
        %v1059 = vmax.f32 %v984, 0.0
        %v1060 = vmax.f32 %v987, 0.0
        %v1061 = vmax.f32 %v989, 0.0
        %v1062 = vmax.f32 %v992, 0.0
        %v1063 = vmax.f32 %v994, 0.0
        %v1064 = vmax.f32 %v997, 0.0
        %v1065 = vmax.f32 %v999, 0.0
        %v1066 = vmax.f32 %v1002, 0.0
        %v1067 = vmax.f32 %v1004, 0.0
        %v1068 = vmax.f32 %v1007, 0.0
        %v1069 = vmax.f32 %v1009, 0.0
        %v1070 = vmax.f32 %v1012, 0.0
        %v1071 = vmax.f32 %v1014, 0.0
        %v1072 = vmax.f32 %v1017, 0.0
        %v1073 = vmax.f32 %v1019, 0.0
        %v1074 = vmax.f32 %v1022, 0.0
        %v1075 = vmax.f32 %v1024, 0.0
        %v1076 = vmax.f32 %v1027, 0.0
        %v1077 = vmax.f32 %v1029, 0.0
        %v1078 = vmax.f32 %v1032, 0.0
        %v1079 = vmax.f32 %v1034, 0.0
        %v1080 = vmax.f32 %v1037, 0.0
        %v1081 = vmax.f32 %v1039, 0.0
        %v1082 = vmax.f32 %v1042, 0.0
        %v1083 = vmax.f32 %v1044, 0.0
        %v1084 = vmax.f32 %v1047, 0.0
        %v1085 = vmax.f32 %v1049, 0.0
        %v1086 = vmax.f32 %v1052, 0.0
        %v1087 = vmax.f32 %v1054, 0.0
        %v1088 = vpack.c.bf16 %v1057, %v1056
        %v1089 = vpack.c.bf16 %v1059, %v1058
        %v1090 = vpack.c.bf16 %v1061, %v1060
        %v1091 = vpack.c.bf16 %v1063, %v1062
        %v1092 = vpack.c.bf16 %v1065, %v1064
        %v1093 = vpack.c.bf16 %v1067, %v1066
        %v1094 = vpack.c.bf16 %v1069, %v1068
        %v1095 = vpack.c.bf16 %v1071, %v1070
        %v1096 = vpack.c.bf16 %v1073, %v1072
        %v1097 = vpack.c.bf16 %v1075, %v1074
        %v1098 = vpack.c.bf16 %v1077, %v1076
        %v1099 = vpack.c.bf16 %v1079, %v1078
        %v1100 = vpack.c.bf16 %v1081, %v1080
        %v1101 = vpack.c.bf16 %v1083, %v1082
        %v1102 = vpack.c.bf16 %v1085, %v1084
        %v1103 = vpack.c.bf16 %v1087, %v1086
        %v1104 = vld [vmem:[%s5] sm:$0xf]
        %v1105 = vld [vmem:[%s5 + $0x4] sm:$0xf]
        %v1106 = vld [vmem:[%s5 + $0x8] sm:$0xf]
        %v1107 = vld [vmem:[%s5 + $0xc] sm:$0xf]
        %v1108 = vld [vmem:[%s5 + $0x10] sm:$0xf]
        %v1109 = vld [vmem:[%s5 + $0x14] sm:$0xf]
        %v1110 = vld [vmem:[%s5 + $0x18] sm:$0xf]
        %v1111 = vld [vmem:[%s5 + $0x1c] sm:$0xf]
        %v1112 = vld [vmem:[%s5 + $0x20] sm:$0xf]
        %v1113 = vld [vmem:[%s5 + $0x24] sm:$0xf]
        %v1114 = vld [vmem:[%s5 + $0x28] sm:$0xf]
        %v1115 = vld [vmem:[%s5 + $0x2c] sm:$0xf]
        %v1116 = vld [vmem:[%s5 + $0x30] sm:$0xf]
        %v1117 = vld [vmem:[%s5 + $0x34] sm:$0xf]
        %v1118 = vld [vmem:[%s5 + $0x38] sm:$0xf]
        %v1119 = vld [vmem:[%s5 + $0x3c] sm:$0xf]
        %v1120 = vld [vmem:[%s6] sm:$0x1]
        %v1122 = vperm.slane %v1120, 0
        %v1140 = vunpack.c.l.b16 %v1104
        %v1141 = vunpack.c.l.b16 %v1105
        %v1142 = vunpack.c.l.b16 %v1106
        %v1143 = vunpack.c.l.b16 %v1107
        %v1144 = vunpack.c.l.b16 %v1108
        %v1145 = vunpack.c.l.b16 %v1109
        %v1146 = vunpack.c.l.b16 %v1110
        %v1147 = vunpack.c.l.b16 %v1111
        %v1148 = vunpack.c.l.b16 %v1112
        %v1149 = vunpack.c.l.b16 %v1113
        %v1150 = vunpack.c.l.b16 %v1114
        %v1151 = vunpack.c.l.b16 %v1115
        %v1152 = vunpack.c.l.b16 %v1116
        %v1153 = vunpack.c.l.b16 %v1117
        %v1154 = vunpack.c.l.b16 %v1118
        %v1155 = vunpack.c.l.b16 %v1119
        %v1156 = vpack.c.b16 %v1141, %v1140
        %v1157 = vpack.c.b16 %v1143, %v1142
        %v1158 = vpack.c.b16 %v1145, %v1144
        %v1159 = vpack.c.b16 %v1147, %v1146
        %v1160 = vpack.c.b16 %v1149, %v1148
        %v1161 = vpack.c.b16 %v1151, %v1150
        %v1162 = vpack.c.b16 %v1153, %v1152
        %v1163 = vpack.c.b16 %v1155, %v1154
        %1172 = vmatpush.bf16.msra.mxu0 %v1163
        %1173 = vmatpush.bf16.msra.mxu0 %v1162
        %1174 = vmatpush.bf16.msra.mxu0 %v1161
        %1175 = vmatpush.bf16.msra.mxu0 %v1160
        %1176 = vmatpush.bf16.msra.mxu0 %v1159
        %1177 = vmatpush.bf16.msra.mxu0 %v1158
        %1178 = vmatpush.bf16.msra.mxu0 %v1157
        %1179 = vmatpush.bf16.msra.mxu0 %v1156
        %1180 = vmatmul.bf16.gmra.mxu0 %v1088
        %v1181 = vpop.f32.mrf.mxu0
        %v1182 = vadd.f32 %v1122, %v1181
        %v1183 = vpop.f32.mrf.mxu0
        %v1184 = vadd.f32 %v1122, %v1183
        %1185 = vmatmul.bf16.gmra.mxu0 %v1089
        %v1186 = vpop.f32.mrf.mxu0
        %v1187 = vadd.f32 %v1122, %v1186
        %v1188 = vpop.f32.mrf.mxu0
        %v1189 = vadd.f32 %v1122, %v1188
        %1190 = vmatmul.bf16.gmra.mxu0 %v1090
        %v1191 = vpop.f32.mrf.mxu0
        %v1192 = vadd.f32 %v1122, %v1191
        %v1193 = vpop.f32.mrf.mxu0
        %v1194 = vadd.f32 %v1122, %v1193
        %1195 = vmatmul.bf16.gmra.mxu0 %v1091
        %v1196 = vpop.f32.mrf.mxu0
        %v1197 = vadd.f32 %v1122, %v1196
        %v1198 = vpop.f32.mrf.mxu0
        %v1199 = vadd.f32 %v1122, %v1198
        %1200 = vmatmul.bf16.gmra.mxu0 %v1092
        %v1201 = vpop.f32.mrf.mxu0
        %v1202 = vadd.f32 %v1122, %v1201
        %v1203 = vpop.f32.mrf.mxu0
        %v1204 = vadd.f32 %v1122, %v1203
        %1205 = vmatmul.bf16.gmra.mxu0 %v1093
        %v1206 = vpop.f32.mrf.mxu0
        %v1207 = vadd.f32 %v1122, %v1206
        %v1208 = vpop.f32.mrf.mxu0
        %v1209 = vadd.f32 %v1122, %v1208
        %1210 = vmatmul.bf16.gmra.mxu0 %v1094
        %v1211 = vpop.f32.mrf.mxu0
        %v1212 = vadd.f32 %v1122, %v1211
        %v1213 = vpop.f32.mrf.mxu0
        %v1214 = vadd.f32 %v1122, %v1213
        %1215 = vmatmul.bf16.gmra.mxu0 %v1095
        %v1216 = vpop.f32.mrf.mxu0
        %v1217 = vadd.f32 %v1122, %v1216
        %v1218 = vpop.f32.mrf.mxu0
        %v1219 = vadd.f32 %v1122, %v1218
        %1220 = vmatmul.bf16.gmra.mxu0 %v1096
        %v1221 = vpop.f32.mrf.mxu0
        %v1222 = vadd.f32 %v1122, %v1221
        %v1223 = vpop.f32.mrf.mxu0
        %v1224 = vadd.f32 %v1122, %v1223
        %1225 = vmatmul.bf16.gmra.mxu0 %v1097
        %v1226 = vpop.f32.mrf.mxu0
        %v1227 = vadd.f32 %v1122, %v1226
        %v1228 = vpop.f32.mrf.mxu0
        %v1229 = vadd.f32 %v1122, %v1228
        %1230 = vmatmul.bf16.gmra.mxu0 %v1098
        %v1231 = vpop.f32.mrf.mxu0
        %v1232 = vadd.f32 %v1122, %v1231
        %v1233 = vpop.f32.mrf.mxu0
        %v1234 = vadd.f32 %v1122, %v1233
        %1235 = vmatmul.bf16.gmra.mxu0 %v1099
        %v1236 = vpop.f32.mrf.mxu0
        %v1237 = vadd.f32 %v1122, %v1236
        %v1238 = vpop.f32.mrf.mxu0
        %v1239 = vadd.f32 %v1122, %v1238
        %1240 = vmatmul.bf16.gmra.mxu0 %v1100
        %v1241 = vpop.f32.mrf.mxu0
        %v1242 = vadd.f32 %v1122, %v1241
        %v1243 = vpop.f32.mrf.mxu0
        %v1244 = vadd.f32 %v1122, %v1243
        %1245 = vmatmul.bf16.gmra.mxu0 %v1101
        %v1246 = vpop.f32.mrf.mxu0
        %v1247 = vadd.f32 %v1122, %v1246
        %v1248 = vpop.f32.mrf.mxu0
        %v1249 = vadd.f32 %v1122, %v1248
        %1250 = vmatmul.bf16.gmra.mxu0 %v1102
        %v1251 = vpop.f32.mrf.mxu0
        %v1252 = vadd.f32 %v1122, %v1251
        %v1253 = vpop.f32.mrf.mxu0
        %v1254 = vadd.f32 %v1122, %v1253
        %1255 = vmatmul.bf16.gmra.mxu0 %v1103
        %v1256 = vpop.f32.mrf.mxu0
        %v1257 = vadd.f32 %v1122, %v1256
        %v1258 = vpop.f32.mrf.mxu0
        %v1259 = vadd.f32 %v1122, %v1258
        %1260 = vdwg.mxu0
        %1261 = vst [vmem:[%s272] sm:$0xff] %v1182
        %1262 = vst [vmem:[%s272 + $0x8] sm:$0xff] %v1184
        %1263 = vst [vmem:[%s272 + $0x10] sm:$0xff] %v1187
        %1264 = vst [vmem:[%s272 + $0x18] sm:$0xff] %v1189
        %1265 = vst [vmem:[%s272 + $0x20] sm:$0xff] %v1192
        %1266 = vst [vmem:[%s272 + $0x28] sm:$0xff] %v1194
        %1267 = vst [vmem:[%s272 + $0x30] sm:$0xff] %v1197
        %1268 = vst [vmem:[%s272 + $0x38] sm:$0xff] %v1199
        %1269 = vst [vmem:[%s272 + $0x40] sm:$0xff] %v1202
        %1270 = vst [vmem:[%s272 + $0x48] sm:$0xff] %v1204
        %1271 = vst [vmem:[%s272 + $0x50] sm:$0xff] %v1207
        %1272 = vst [vmem:[%s272 + $0x58] sm:$0xff] %v1209
        %1273 = vst [vmem:[%s272 + $0x60] sm:$0xff] %v1212
        %1274 = vst [vmem:[%s272 + $0x68] sm:$0xff] %v1214
        %1275 = vst [vmem:[%s272 + $0x70] sm:$0xff] %v1217
        %1276 = vst [vmem:[%s272 + $0x78] sm:$0xff] %v1219
        %1277 = vst [vmem:[%s272 + $0x80] sm:$0xff] %v1222
        %1278 = vst [vmem:[%s272 + $0x88] sm:$0xff] %v1224
        %1279 = vst [vmem:[%s272 + $0x90] sm:$0xff] %v1227
        %1280 = vst [vmem:[%s272 + $0x98] sm:$0xff] %v1229
        %1281 = vst [vmem:[%s272 + $0xa0] sm:$0xff] %v1232
        %1282 = vst [vmem:[%s272 + $0xa8] sm:$0xff] %v1234
        %1283 = vst [vmem:[%s272 + $0xb0] sm:$0xff] %v1237
        %1284 = vst [vmem:[%s272 + $0xb8] sm:$0xff] %v1239
        %1285 = vst [vmem:[%s272 + $0xc0] sm:$0xff] %v1242
        %1286 = vst [vmem:[%s272 + $0xc8] sm:$0xff] %v1244
        %1287 = vst [vmem:[%s272 + $0xd0] sm:$0xff] %v1247
        %1288 = vst [vmem:[%s272 + $0xd8] sm:$0xff] %v1249
        %1289 = vst [vmem:[%s272 + $0xe0] sm:$0xff] %v1252
        %1290 = vst [vmem:[%s272 + $0xe8] sm:$0xff] %v1254
        %1291 = vst [vmem:[%s272 + $0xf0] sm:$0xff] %v1257
        %1292 = vst [vmem:[%s272 + $0xf8] sm:$0xff] %v1259
        %s1293 = sand.u32 %s181, 1
        %s1294 = scalar_lea.sflag [#allocation3], %s1293
        %s1295 = sand.u32 %s181, 1
        %s1296 = smul.addr %s1295, 256
        %s1297 = scalar_lea.vmem [#allocation2], %s1296
        // Predicated region
        $region49: #{tpu_custom_call.1} parent=47 // pred_check
          %p1298 = pneg %p191
        $region50: #{tpu_custom_call.1} parent=47 // pred_check_branch
          %1300 = sbr.rel (%p1298) target = $region52
        $region51: #{tpu_custom_call.1} parent=47 // pred_region
          %s1301 = smul.u32 32, %s21
          %1303 = vsyncadd %s1294, 0
          %s1304 = smul.addr %s1301, 8
          %s1305 = scalar_lea.hbm %s7, %s1304
          %s1306 = sshll.u32 %s1297, 4
          %s1307 = int_to_ptr.vmem [resolvable:$true] %s1306
          %s1308 = sshll.u32 %s1305, 4
          %s1309 = int_to_ptr.hbm [resolvable:$true] %s1308
          %1314 = dma.vmem_to_hbm [thread:$0]  %s1307, 4096, %s1309, %s1294, 128, 128, 8
        $region52: #{tpu_custom_call.1} parent=47 // pred_fallthru
          _
      $region48: #{tpu_custom_call.1} parent=5 // pred_fallthru
        _
      %p1315 = scmp.le.s32.totalorder 2, %s16
      // Predicated region
      $region53: #{tpu_custom_call.1} parent=5 // pred_check
        %p1316 = pneg %p1315
      $region54: #{tpu_custom_call.1} parent=5 // pred_check_branch
        %1318 = sbr.rel (%p1316) target = $region56
      $region55: #{tpu_custom_call.1} parent=5 // pred_region
        %s1319 = ssub.s32 %s16, 2
        // Predicated region
        $region57: #{tpu_custom_call.1} parent=55 // pred_check
          %p1320 = pneg %p197
        $region58: #{tpu_custom_call.1} parent=55 // pred_check_branch
          %1322 = sbr.rel (%p1320) target = $region60
        $region59: #{tpu_custom_call.1} parent=55 // pred_region
          %s1323 = sand.u32 %s182, 1
          %s1324 = scalar_lea.sflag [#allocation3], %s1323
          %s1325 = sand.u32 %s182, 1
          %s1326 = smul.addr %s1325, 256
          %s1327 = scalar_lea.vmem [#allocation2], %s1326
          %1329 = dma.done %s1324, 4096
        $region60: #{tpu_custom_call.1} parent=55 // pred_fallthru
          _
      $region56: #{tpu_custom_call.1} parent=5 // pred_fallthru
        _
    $region6: #{tpu_custom_call.1} parent=1 // loop_footer
      %s20 = sadd.s32 1, %s16
    $region7: #{tpu_custom_call.1} parent=1 // loop_footer_branch
      %15 = sbr.rel target = $region3
    $region8: #{tpu_custom_call.1} parent=1 // loop_exit
      _
    %1330 = vsyncpa [#allocation3], 1
    %s1331 = scalar_lea.sflag [#allocation3], 1
    %1332 = vsyncpa %s1331, 1

</llo_original>
